<compile_context>
chip_gen: v7x
topology: tpu7x:2x2x1
jax: 0.10.0
libtpu: 0.0.40
codegen_flags: <defaults>
</compile_context>

<pallas_src>
import functools

import jax
import jax.numpy as jnp
from jax.experimental import pallas as pl
from jax.experimental.pallas import tpu as pltpu

LANE = 128  # TPU lane width; hidden dim (64) is zero-padded to this.


def _round_up(n, m):
    return ((n + m - 1) // m) * m


# ---------------------------------------------------------------------------
# Kernel: one (TB, ·) batch tile through the whole fused 3-layer MLP.
# bf16 MXU operands, f32 accumulation, f32 elementwise epilogue, narrow store.
# ---------------------------------------------------------------------------
def dqn_kernel(x_ref, w1_ref, b1_ref, w2_ref, b2_ref, w3_ref, b3_ref, out_ref):
    # fc1 + ReLU
    x = x_ref[...].astype(jnp.bfloat16)
    h1 = jnp.dot(x, w1_ref[...], preferred_element_type=jnp.float32)
    h1 = jnp.maximum(h1 + b1_ref[...], 0.0)
    # fc2 + ReLU
    h2 = jnp.dot(h1.astype(jnp.bfloat16), w2_ref[...],
                 preferred_element_type=jnp.float32)
    h2 = jnp.maximum(h2 + b2_ref[...], 0.0)
    # fc3 (no activation) — narrow (TB, action_size) store, tiny HBM writeback.
    out = jnp.dot(h2.astype(jnp.bfloat16), w3_ref[...],
                  preferred_element_type=jnp.float32)
    out_ref[...] = (out + b3_ref[...]).astype(out_ref.dtype)


# ---------------------------------------------------------------------------
# Parameter prep (call ONCE, outside the per-step path): zero-pad the hidden
# dim to 128 lanes, cast weights to bf16.  Action dim is left unpadded.
# ---------------------------------------------------------------------------
def prepare_params(params):
    w1, b1, w2, b2, w3, b3 = (params[k] for k in ("w1", "b1", "w2", "b2", "w3", "b3"))
    hid = w1.shape[1]
    hp = _round_up(hid, LANE)
    w1p = jnp.pad(w1, ((0, 0), (0, hp - hid))).astype(jnp.bfloat16)
    b1p = jnp.pad(b1, ((0, 0), (0, hp - hid))).astype(jnp.float32)
    w2p = jnp.pad(w2, ((0, hp - hid), (0, hp - hid))).astype(jnp.bfloat16)
    b2p = jnp.pad(b2, ((0, 0), (0, hp - hid))).astype(jnp.float32)
    w3p = jnp.pad(w3, ((0, hp - hid), (0, 0))).astype(jnp.bfloat16)
    b3p = b3.astype(jnp.float32)
    return (w1p, b1p, w2p, b2p, w3p, b3p)


# ---------------------------------------------------------------------------
# Wrapper: batch-tiled pallas_call.  padded_params comes from prepare_params.
# ---------------------------------------------------------------------------
@functools.partial(jax.jit, static_argnames=("tb_max",))
def dqn_forward(x, padded_params, *, tb_max=512):
    """x: (B, state_size) -> (B, action_size) float32."""
    w1, b1, w2, b2, w3, b3 = padded_params
    B, S = x.shape
    H = w1.shape[1]
    A = w3.shape[1]

    # Tiny-batch guard: keep the batch block sublane-aligned (>= 8 rows).
    if B < 8:
        x = jnp.pad(x, ((0, 8 - B), (0, 0)))
    Bp = x.shape[0]

    # Batch tile: large enough to amortize ~0.35 us/step grid overhead, but at
    # most ceil(B/2) (sublane-rounded) so the "parallel" axis gives >= 2
    # balanced tiles for v7x's two TensorCores when B allows.
    TB = max(8, min(tb_max, _round_up(pl.cdiv(Bp, 2), 8)))
    grid = (pl.cdiv(Bp, TB),)  # ragged final block handled by Pallas.

    const = lambda i: (0, 0)   # weights/biases stay VMEM-resident.

    flops = 2 * Bp * (S * H + H * H + H * A)
    bytes_accessed = (
        x.size * x.dtype.itemsize
        + Bp * A * 4
        + sum(int(t.size) * t.dtype.itemsize for t in padded_params)
    )

    out = pl.pallas_call(
        dqn_kernel,
        out_shape=jax.ShapeDtypeStruct((Bp, A), jnp.float32),
        grid=grid,
        in_specs=[
            pl.BlockSpec((TB, S), lambda i: (i, 0)),   # x: streamed per batch tile
            pl.BlockSpec(w1.shape, const),
            pl.BlockSpec(b1.shape, const),
            pl.BlockSpec(w2.shape, const),
            pl.BlockSpec(b2.shape, const),
            pl.BlockSpec(w3.shape, const),
            pl.BlockSpec(b3.shape, const),
        ],
        out_specs=pl.BlockSpec((TB, A), lambda i: (i, 0)),  # narrow, full action dim
        compiler_params=pltpu.CompilerParams(
            dimension_semantics=("parallel",)),
        cost_estimate=pl.CostEstimate(
            flops=flops, transcendentals=0, bytes_accessed=bytes_accessed),
    )(x, w1, b1, w2, b2, w3, b3)

    return out[:B] if Bp != B else out


# ---------------------------------------------------------------------------
# Init (mimics nn.Linear U(-1/sqrt(fan_in), 1/sqrt(fan_in))) and references.
# ---------------------------------------------------------------------------
def init_params(key, state_size, action_size, hidden=64):
    ks = jax.random.split(key, 6)

    def linear(kw, kb, fan_in, fan_out):
        bound = 1.0 / jnp.sqrt(jnp.float32(fan_in))
        w = jax.random.uniform(kw, (fan_in, fan_out), jnp.float32, -bound, bound)
        b = jax.random.uniform(kb, (1, fan_out), jnp.float32, -bound, bound)
        return w, b

    w1, b1 = linear(ks[0], ks[1], state_size, hidden)
    w2, b2 = linear(ks[2], ks[3], hidden, hidden)
    w3, b3 = linear(ks[4], ks[5], hidden, action_size)
    return {"w1": w1, "b1": b1, "w2": w2, "b2": b2, "w3": w3, "b3": b3}


def dqn_reference(x, params, *, emulate_bf16=True):
    """Pure-JAX reference. emulate_bf16 mirrors the kernel's bf16 MXU inputs."""
    cast = (lambda a: a.astype(jnp.bfloat16)) if emulate_bf16 else (lambda a: a)

    def dense(a, w, b):
        return jnp.dot(cast(a), cast(w), preferred_element_type=jnp.float32) + b

    h1 = jnp.maximum(dense(x, params["w1"], params["b1"]), 0.0)
    h2 = jnp.maximum(dense(h1, params["w2"], params["b2"]), 0.0)
    return dense(h2, params["w3"], params["b3"])


if __name__ == "__main__":
    key = jax.random.PRNGKey(0)
    k_params, k_x, k_x2, k_x3 = jax.random.split(key, 4)

    state_size = 16
    action_size = 8

    params = init_params(k_params, state_size, action_size)
    padded_params = prepare_params(params)  # hoisted: once, not per forward call

    # Small batch: single grid step.
    x = jax.random.normal(k_x, (8, state_size), jnp.float32)
    out = jax.block_until_ready(dqn_forward(x, padded_params))
    assert out.shape == (8, action_size)
    ref = dqn_reference(x, params)
    assert jnp.allclose(out, ref, atol=3e-3, rtol=3e-3), "mismatch (small batch)"
    ref_f32 = dqn_reference(x, params, emulate_bf16=False)
    assert jnp.allclose(out, ref_f32, atol=5e-2, rtol=5e-2), "bf16 drift too large"

    # Non-multiple batch: two tiles with a ragged final block (tests that the
    # narrow-output tail-tile store masking is correct).
    x2 = jax.random.normal(k_x2, (300, state_size), jnp.float32)
    out2 = jax.block_until_ready(dqn_forward(x2, padded_params))
    assert out2.shape == (300, action_size)
    ref2 = dqn_reference(x2, params)
    assert jnp.allclose(out2, ref2, atol=3e-3, rtol=3e-3), "mismatch (ragged batch)"

    # Larger batch: several full 512-row tiles (megacore-parallel path).
    x3 = jax.random.normal(k_x3, (2048, state_size), jnp.float32)
    out3 = jax.block_until_ready(dqn_forward(x3, padded_params))
    assert out3.shape == (2048, action_size)
    ref3 = dqn_reference(x3, params)
    assert jnp.allclose(out3, ref3, atol=3e-3, rtol=3e-3), "mismatch (large batch)"

    print("KERNEL_OK")
</pallas_src>

<mosaic_0001>
module attributes {stable_mosaic.version = 11 : i64} {
  func.func @dqn_kernel(%arg0: i32, %arg1: memref<8x16xf32, #tpu.memory_space<vmem>>, %arg2: memref<16x128xbf16, #tpu.memory_space<vmem>>, %arg3: memref<1x128xf32, #tpu.memory_space<vmem>>, %arg4: memref<128x128xbf16, #tpu.memory_space<vmem>>, %arg5: memref<1x128xf32, #tpu.memory_space<vmem>>, %arg6: memref<128x8xbf16, #tpu.memory_space<vmem>>, %arg7: memref<1x8xf32, #tpu.memory_space<vmem>>, %arg8: memref<8x8xf32, #tpu.memory_space<vmem>>) attributes {dimension_semantics = [#tpu.dimension_semantics<parallel>], iteration_bounds = array<i64: 1>, scalar_prefetch = 0 : i64, scratch_operands = 0 : i64, tpu.core_type = #tpu.core_type<tc>, window_params = [{transform_indices = @transform_0, window_bounds = array<i64: 8, 16>}, {pipeline_mode = #tpu.pipeline_mode<synchronous>, transform_indices = @transform_1, window_bounds = array<i64: 16, 128>}, {pipeline_mode = #tpu.pipeline_mode<synchronous>, transform_indices = @transform_2, window_bounds = array<i64: 1, 128>}, {pipeline_mode = #tpu.pipeline_mode<synchronous>, transform_indices = @transform_3, window_bounds = array<i64: 128, 128>}, {pipeline_mode = #tpu.pipeline_mode<synchronous>, transform_indices = @transform_4, window_bounds = array<i64: 1, 128>}, {pipeline_mode = #tpu.pipeline_mode<synchronous>, transform_indices = @transform_5, window_bounds = array<i64: 128, 8>}, {pipeline_mode = #tpu.pipeline_mode<synchronous>, transform_indices = @transform_6, window_bounds = array<i64: 1, 8>}, {transform_indices = @transform_7, window_bounds = array<i64: 8, 8>}]} {
    %c0 = arith.constant 0 : index
    %c0_0 = arith.constant 0 : index
    %0 = vector.load %arg1[%c0, %c0_0] : memref<8x16xf32, #tpu.memory_space<vmem>>, vector<8x16xf32>
    %1 = arith.truncf %0 : vector<8x16xf32> to vector<8x16xbf16>
    %c0_1 = arith.constant 0 : index
    %c0_2 = arith.constant 0 : index
    %2 = vector.load %arg2[%c0_1, %c0_2] : memref<16x128xbf16, #tpu.memory_space<vmem>>, vector<16x128xbf16>
    %cst = arith.constant dense<0.000000e+00> : vector<8x128xf32>
    %3 = tpu.matmul %1, %2, %cst {dimension_numbers = #tpu.dot_dimension_numbers<[1], [0], [0], [1], [0, 0, 1, 1], [], []>} : vector<8x16xbf16>, vector<16x128xbf16>, vector<8x128xf32> -> vector<8x128xf32>
    %c0_3 = arith.constant 0 : index
    %c0_4 = arith.constant 0 : index
    %4 = vector.load %arg3[%c0_3, %c0_4] : memref<1x128xf32, #tpu.memory_space<vmem>>, vector<1x128xf32>
    %5 = vector.broadcast %4 : vector<1x128xf32> to vector<8x128xf32>
    %6 = arith.addf %3, %5 : vector<8x128xf32>
    %cst_5 = arith.constant 0.000000e+00 : f32
    %7 = vector.broadcast %cst_5 : f32 to vector<8x128xf32>
    %8 = arith.maximumf %6, %7 : vector<8x128xf32>
    %9 = arith.truncf %8 : vector<8x128xf32> to vector<8x128xbf16>
    %c0_6 = arith.constant 0 : index
    %c0_7 = arith.constant 0 : index
    %10 = vector.load %arg4[%c0_6, %c0_7] : memref<128x128xbf16, #tpu.memory_space<vmem>>, vector<128x128xbf16>
    %cst_8 = arith.constant dense<0.000000e+00> : vector<8x128xf32>
    %11 = tpu.matmul %9, %10, %cst_8 {dimension_numbers = #tpu.dot_dimension_numbers<[1], [0], [0], [1], [0, 0, 1, 1], [], []>} : vector<8x128xbf16>, vector<128x128xbf16>, vector<8x128xf32> -> vector<8x128xf32>
    %c0_9 = arith.constant 0 : index
    %c0_10 = arith.constant 0 : index
    %12 = vector.load %arg5[%c0_9, %c0_10] : memref<1x128xf32, #tpu.memory_space<vmem>>, vector<1x128xf32>
    %13 = vector.broadcast %12 : vector<1x128xf32> to vector<8x128xf32>
    %14 = arith.addf %11, %13 : vector<8x128xf32>
    %cst_11 = arith.constant 0.000000e+00 : f32
    %15 = vector.broadcast %cst_11 : f32 to vector<8x128xf32>
    %16 = arith.maximumf %14, %15 : vector<8x128xf32>
    %17 = arith.truncf %16 : vector<8x128xf32> to vector<8x128xbf16>
    %c0_12 = arith.constant 0 : index
    %c0_13 = arith.constant 0 : index
    %18 = vector.load %arg6[%c0_12, %c0_13] : memref<128x8xbf16, #tpu.memory_space<vmem>>, vector<128x8xbf16>
    %cst_14 = arith.constant dense<0.000000e+00> : vector<8x8xf32>
    %19 = tpu.matmul %17, %18, %cst_14 {dimension_numbers = #tpu.dot_dimension_numbers<[1], [0], [0], [1], [0, 0, 1, 1], [], []>} : vector<8x128xbf16>, vector<128x8xbf16>, vector<8x8xf32> -> vector<8x8xf32>
    %c0_15 = arith.constant 0 : index
    %c0_16 = arith.constant 0 : index
    %20 = vector.load %arg7[%c0_15, %c0_16] : memref<1x8xf32, #tpu.memory_space<vmem>>, vector<1x8xf32>
    %21 = vector.broadcast %20 : vector<1x8xf32> to vector<8x8xf32>
    %22 = arith.addf %19, %21 : vector<8x8xf32>
    %c0_17 = arith.constant 0 : index
    %c0_18 = arith.constant 0 : index
    %23 = vector.load %arg8[%c0_17, %c0_18] : memref<8x8xf32, #tpu.memory_space<vmem>>, vector<8x8xf32>
    tpu.vector_store %arg8[%c0_17, %c0_18], %22 {strides = array<i32>} : memref<8x8xf32, #tpu.memory_space<vmem>>, vector<8x8xf32>,
    return
  }
  func.func @transform_0(%arg0: i32) -> (i32, i32) {
    %c0_i32 = arith.constant 0 : i32
    %c0_i32_0 = arith.constant 0 : i32
    return %arg0, %c0_i32 : i32, i32
  }
  func.func @transform_1(%arg0: i32) -> (i32, i32) {
    %c0_i32 = arith.constant 0 : i32
    %c0_i32_0 = arith.constant 0 : i32
    %c0_i32_1 = arith.constant 0 : i32
    return %c0_i32, %c0_i32_0 : i32, i32
  }
  func.func @transform_2(%arg0: i32) -> (i32, i32) {
    %c0_i32 = arith.constant 0 : i32
    %c0_i32_0 = arith.constant 0 : i32
    %c0_i32_1 = arith.constant 0 : i32
    return %c0_i32, %c0_i32_0 : i32, i32
  }
  func.func @transform_3(%arg0: i32) -> (i32, i32) {
    %c0_i32 = arith.constant 0 : i32
    %c0_i32_0 = arith.constant 0 : i32
    %c0_i32_1 = arith.constant 0 : i32
    return %c0_i32, %c0_i32_0 : i32, i32
  }
  func.func @transform_4(%arg0: i32) -> (i32, i32) {
    %c0_i32 = arith.constant 0 : i32
    %c0_i32_0 = arith.constant 0 : i32
    %c0_i32_1 = arith.constant 0 : i32
    return %c0_i32, %c0_i32_0 : i32, i32
  }
  func.func @transform_5(%arg0: i32) -> (i32, i32) {
    %c0_i32 = arith.constant 0 : i32
    %c0_i32_0 = arith.constant 0 : i32
    %c0_i32_1 = arith.constant 0 : i32
    return %c0_i32, %c0_i32_0 : i32, i32
  }
  func.func @transform_6(%arg0: i32) -> (i32, i32) {
    %c0_i32 = arith.constant 0 : i32
    %c0_i32_0 = arith.constant 0 : i32
    %c0_i32_1 = arith.constant 0 : i32
    return %c0_i32, %c0_i32_0 : i32, i32
  }
  func.func @transform_7(%arg0: i32) -> (i32, i32) {
    %c0_i32 = arith.constant 0 : i32
    %c0_i32_0 = arith.constant 0 : i32
    return %arg0, %c0_i32 : i32, i32
  }
}

</mosaic_0001>

<llo_original>
// kernel: dqn_forward.1
$region0: #{dqn_forward.1}
  #allocation0 [shape = 'u32[]', space=smem, size = 0x4, offset = 0x4, fixed_abs, tag = 'smem constant byte address 0x4 - core index']
  #allocation1 [shape = 'u32[144,128]{1,0:T(1,128)}', space=vmem, size = 0x12000, scoped, tag = 'internal scratch']
  %s0 = inlined_call_operand.vmem [shape: f32[8,16], index: 0, kind: input, shape index: {}]
  %s1 = inlined_call_operand.hbm [shape: bf16[16,128], index: 1, kind: input, shape index: {}]
  %s2 = inlined_call_operand.vmem [shape: f32[1,128], index: 2, kind: input, shape index: {}]
  %s3 = inlined_call_operand.vmem [shape: bf16[128,128], index: 3, kind: input, shape index: {}]
  %s4 = inlined_call_operand.vmem [shape: f32[1,128], index: 4, kind: input, shape index: {}]
  %s5 = inlined_call_operand.vmem [shape: bf16[128,8], index: 5, kind: input, shape index: {}]
  %s6 = inlined_call_operand.vmem [shape: f32[1,8], index: 6, kind: input, shape index: {}]
  %s7 = inlined_call_operand.hbm [shape: f32[8,8], index: 7, kind: output, shape index: {}]
  %s8 = sld [smem:[#allocation0]]
  $region42: #{dqn_forward.1} parent=0
    _
  %s10 = ssub.s32 1, %s8
  %s11 = scalar_select 0, %s10, %s8
  $region1: #{dqn_forward.1} parent=0
    #allocation2 [shape = 'u8[4096]{0}', space=vmem, size = 0x1000, scoped, tag = 'input window, operand 1, single buffered']
    #allocation3 [shape = 's32[1]{0}', space=sflag, size = 0x4, scoped, tag = 'scoped memory for dqn_forward.1']
    #allocation4 [shape = 's32[1]{0}', space=sflag, size = 0x4, scoped, tag = 'scoped memory for dqn_forward.1']
    #allocation5 [shape = 'u8[4096]{0}', space=vmem, size = 0x1000, scoped, tag = 'output window, operand 0, single buffered']
    %12 = vsyncpa [#allocation3], 0
    %13 = vsyncpa [#allocation4], 0
    // Predicated region
    $region2: #{dqn_forward.1} parent=1 // pred_check
      _
    $region3: #{dqn_forward.1} parent=1 // pred_check_branch
      %15 = sbr.rel (0) target = $region5
    $region4: #{dqn_forward.1} parent=1 // pred_region
      _
    $region5: #{dqn_forward.1} parent=1 // pred_fallthru
      _
    // Predicated region
    $region6: #{dqn_forward.1} parent=1 // pred_check
      _
    $region7: #{dqn_forward.1} parent=1 // pred_check_branch
      %17 = sbr.rel (0) target = $region9
    $region8: #{dqn_forward.1} parent=1 // pred_region
      %s19 = ssub.s32 128, 128
      %20 = vsyncadd [#allocation3], %s19
      %s21 = sshll.u32 [#allocation2], 4
      %s22 = int_to_ptr.vmem [resolvable:$true] %s21
      %27 = dma.hbm_to_vmem [thread:$0]  %s1, 128, %s22, [#allocation3], 64, 64, 4
    $region9: #{dqn_forward.1} parent=1 // pred_fallthru
      _
    // Predicated region
    $region10: #{dqn_forward.1} parent=1 // pred_check
      _
    $region11: #{dqn_forward.1} parent=1 // pred_check_branch
      %29 = sbr.rel (0) target = $region13
    $region12: #{dqn_forward.1} parent=1 // pred_region
      _
    $region13: #{dqn_forward.1} parent=1 // pred_fallthru
      _
    // Predicated region
    $region14: #{dqn_forward.1} parent=1 // pred_check
      _
    $region15: #{dqn_forward.1} parent=1 // pred_check_branch
      %31 = sbr.rel (0) target = $region17
    $region16: #{dqn_forward.1} parent=1 // pred_region
      _
    $region17: #{dqn_forward.1} parent=1 // pred_fallthru
      _
    // Predicated region
    $region18: #{dqn_forward.1} parent=1 // pred_check
      _
    $region19: #{dqn_forward.1} parent=1 // pred_check_branch
      %33 = sbr.rel (0) target = $region21
    $region20: #{dqn_forward.1} parent=1 // pred_region
      _
    $region21: #{dqn_forward.1} parent=1 // pred_fallthru
      _
    // Predicated region
    $region22: #{dqn_forward.1} parent=1 // pred_check
      _
    $region23: #{dqn_forward.1} parent=1 // pred_check_branch
      %35 = sbr.rel (0) target = $region25
    $region24: #{dqn_forward.1} parent=1 // pred_region
      _
    $region25: #{dqn_forward.1} parent=1 // pred_fallthru
      _
    // Predicated region
    $region26: #{dqn_forward.1} parent=1 // pred_check
      _
    $region27: #{dqn_forward.1} parent=1 // pred_check_branch
      %37 = sbr.rel (0) target = $region29
    $region28: #{dqn_forward.1} parent=1 // pred_region
      _
    $region29: #{dqn_forward.1} parent=1 // pred_fallthru
      _
    // Predicated region
    $region30: #{dqn_forward.1} parent=1 // pred_check
      _
    $region31: #{dqn_forward.1} parent=1 // pred_check_branch
      %39 = sbr.rel (0) target = $region33
    $region32: #{dqn_forward.1} parent=1 // pred_region
      %40 = dma.done [#allocation3], 128
    $region33: #{dqn_forward.1} parent=1 // pred_fallthru
      _
    %v42 = vld [vmem:[%s0] sm:$0xff]
    %v43 = vpack.c.bf16 %v42, %v42
    %v44 = vld [vmem:[#allocation2] sm:$0xf]
    %v45 = vld [vmem:[#allocation2 + $0x4] sm:$0xf]
    %v46 = vld [vmem:[%s2] sm:$0x1]
    %v48 = vlaneseq
    %v49 = vshrl.u32 %v48, 7
    %v50 = vsub.s32 0, %v49
    %v51 = vrot.slane %v46, %v50
    %v55 = vunpack.c.l.b16 %v44
    %v56 = vunpack.c.l.b16 %v45
    %v57 = vpack.c.b16 %v56, %v55
    %vm59 = vcmask 130048
    %v61 = vsel %vm59, %v43, 0
    %63 = vmatprep.subr.bf16.mxu0 0
    %64 = vmatpush1.bf16.msra.mxu0 %v57
    %65 = vmatprep.subr.bf16.mxu0 0
    %66 = vmatpush1.bf16.msra.mxu0 0
    %67 = vmatprep.subr.bf16.mxu0 0
    %68 = vmatpush1.bf16.msra.mxu0 0
    %69 = vmatprep.subr.bf16.mxu0 0
    %70 = vmatpush1.bf16.msra.mxu0 0
    %71 = vmatprep.subr.bf16.mxu0 0
    %72 = vmatpush1.bf16.msra.mxu0 0
    %73 = vmatprep.subr.bf16.mxu0 0
    %74 = vmatpush1.bf16.msra.mxu0 0
    %75 = vmatprep.subr.bf16.mxu0 0
    %76 = vmatpush1.bf16.msra.mxu0 0
    %77 = vmatprep.subr.bf16.mxu0 0
    %78 = vmatpush1.bf16.msra.mxu0 0
    %79 = vmatprep.subr.bf16.mxu0 0
    %80 = vmatpush1.bf16.msra.mxu0 0
    %81 = vmatprep.subr.bf16.mxu0 0
    %82 = vmatpush1.bf16.msra.mxu0 0
    %83 = vmatprep.subr.bf16.mxu0 0
    %84 = vmatpush1.bf16.msra.mxu0 0
    %85 = vmatprep.subr.bf16.mxu0 0
    %86 = vmatpush1.bf16.msra.mxu0 0
    %87 = vmatprep.subr.bf16.mxu0 0
    %88 = vmatpush1.bf16.msra.mxu0 0
    %89 = vmatprep.subr.bf16.mxu0 0
    %90 = vmatpush1.bf16.msra.mxu0 0
    %91 = vmatprep.subr.bf16.mxu0 0
    %92 = vmatpush1.bf16.msra.mxu0 0
    %93 = vmatprep.subr.bf16.mxu0 0
    %94 = vmatpush1.bf16.msra.mxu0 0
    %95 = vmatprep.mubr.bf16.mxu0 0
    %96 = vmatmul.mubr.bf16.gmra.mrb[0].mxu0 %v61
    %v97 = vpop.f32.mrb[0].mxu0
    %v98 = vadd.f32 %v51, %v97
    %v99 = vpop.f32.mrb[0].mxu0
    %v100 = vpop.f32.mrb[0].mxu0
    %v101 = vpop.f32.mrb[0].mxu0
    %102 = vdwg.mxu0
    %v103 = vmax.f32 %v98, 0.0
    %v104 = vpack.c.bf16 %v103, %v103
    %v105 = vld [vmem:[%s3] sm:$0xf]
    %v106 = vld [vmem:[%s3 + $0x4] sm:$0xf]
    %v107 = vld [vmem:[%s3 + $0x8] sm:$0xf]
    %v108 = vld [vmem:[%s3 + $0xc] sm:$0xf]
    %v109 = vld [vmem:[%s3 + $0x10] sm:$0xf]
    %v110 = vld [vmem:[%s3 + $0x14] sm:$0xf]
    %v111 = vld [vmem:[%s3 + $0x18] sm:$0xf]
    %v112 = vld [vmem:[%s3 + $0x1c] sm:$0xf]
    %v113 = vld [vmem:[%s3 + $0x20] sm:$0xf]
    %v114 = vld [vmem:[%s3 + $0x24] sm:$0xf]
    %v115 = vld [vmem:[%s3 + $0x28] sm:$0xf]
    %v116 = vld [vmem:[%s3 + $0x2c] sm:$0xf]
    %v117 = vld [vmem:[%s3 + $0x30] sm:$0xf]
    %v118 = vld [vmem:[%s3 + $0x34] sm:$0xf]
    %v119 = vld [vmem:[%s3 + $0x38] sm:$0xf]
    %v120 = vld [vmem:[%s3 + $0x3c] sm:$0xf]
    %v121 = vld [vmem:[%s4] sm:$0x1]
    %v123 = vlaneseq
    %v124 = vshrl.u32 %v123, 7
    %v125 = vsub.s32 0, %v124
    %v126 = vrot.slane %v121, %v125
    %v144 = vunpack.c.l.b16 %v105
    %v145 = vunpack.c.l.b16 %v106
    %v146 = vunpack.c.l.b16 %v107
    %v147 = vunpack.c.l.b16 %v108
    %v148 = vunpack.c.l.b16 %v109
    %v149 = vunpack.c.l.b16 %v110
    %v150 = vunpack.c.l.b16 %v111
    %v151 = vunpack.c.l.b16 %v112
    %v152 = vunpack.c.l.b16 %v113
    %v153 = vunpack.c.l.b16 %v114
    %v154 = vunpack.c.l.b16 %v115
    %v155 = vunpack.c.l.b16 %v116
    %v156 = vunpack.c.l.b16 %v117
    %v157 = vunpack.c.l.b16 %v118
    %v158 = vunpack.c.l.b16 %v119
    %v159 = vunpack.c.l.b16 %v120
    %v160 = vpack.c.b16 %v145, %v144
    %v161 = vpack.c.b16 %v147, %v146
    %v162 = vpack.c.b16 %v149, %v148
    %v163 = vpack.c.b16 %v151, %v150
    %v164 = vpack.c.b16 %v153, %v152
    %v165 = vpack.c.b16 %v155, %v154
    %v166 = vpack.c.b16 %v157, %v156
    %v167 = vpack.c.b16 %v159, %v158
    %176 = vmatprep.subr.bf16.mxu0 0
    %177 = vmatpush1.bf16.msra.mxu0 %v160
    %178 = vmatprep.subr.bf16.mxu0 0
    %179 = vmatpush1.bf16.msra.mxu0 %v161
    %180 = vmatprep.subr.bf16.mxu0 0
    %181 = vmatpush1.bf16.msra.mxu0 %v162
    %182 = vmatprep.subr.bf16.mxu0 0
    %183 = vmatpush1.bf16.msra.mxu0 %v163
    %184 = vmatprep.subr.bf16.mxu0 0
    %185 = vmatpush1.bf16.msra.mxu0 %v164
    %186 = vmatprep.subr.bf16.mxu0 0
    %187 = vmatpush1.bf16.msra.mxu0 %v165
    %188 = vmatprep.subr.bf16.mxu0 0
    %189 = vmatpush1.bf16.msra.mxu0 %v166
    %190 = vmatprep.subr.bf16.mxu0 0
    %191 = vmatpush1.bf16.msra.mxu0 %v167
    %192 = vmatprep.subr.bf16.mxu0 0
    %193 = vmatpush1.bf16.msra.mxu0 0
    %194 = vmatprep.subr.bf16.mxu0 0
    %195 = vmatpush1.bf16.msra.mxu0 0
    %196 = vmatprep.subr.bf16.mxu0 0
    %197 = vmatpush1.bf16.msra.mxu0 0
    %198 = vmatprep.subr.bf16.mxu0 0
    %199 = vmatpush1.bf16.msra.mxu0 0
    %200 = vmatprep.subr.bf16.mxu0 0
    %201 = vmatpush1.bf16.msra.mxu0 0
    %202 = vmatprep.subr.bf16.mxu0 0
    %203 = vmatpush1.bf16.msra.mxu0 0
    %204 = vmatprep.subr.bf16.mxu0 0
    %205 = vmatpush1.bf16.msra.mxu0 0
    %206 = vmatprep.subr.bf16.mxu0 0
    %207 = vmatpush1.bf16.msra.mxu0 0
    %208 = vmatprep.mubr.bf16.mxu0 0
    %209 = vmatmul.mubr.bf16.gmra.mrb[0].mxu0 %v104
    %v210 = vpop.f32.mrb[0].mxu0
    %v211 = vadd.f32 %v126, %v210
    %v212 = vpop.f32.mrb[0].mxu0
    %v213 = vpop.f32.mrb[0].mxu0
    %v214 = vpop.f32.mrb[0].mxu0
    %215 = vdwg.mxu0
    %v216 = vmax.f32 %v211, 0.0
    %v217 = vpack.c.bf16 %v216, %v216
    %v218 = vld [vmem:[%s5] sm:$0xf]
    %v219 = vld [vmem:[%s5 + $0x4] sm:$0xf]
    %v220 = vld [vmem:[%s5 + $0x8] sm:$0xf]
    %v221 = vld [vmem:[%s5 + $0xc] sm:$0xf]
    %v222 = vld [vmem:[%s5 + $0x10] sm:$0xf]
    %v223 = vld [vmem:[%s5 + $0x14] sm:$0xf]
    %v224 = vld [vmem:[%s5 + $0x18] sm:$0xf]
    %v225 = vld [vmem:[%s5 + $0x1c] sm:$0xf]
    %v226 = vld [vmem:[%s5 + $0x20] sm:$0xf]
    %v227 = vld [vmem:[%s5 + $0x24] sm:$0xf]
    %v228 = vld [vmem:[%s5 + $0x28] sm:$0xf]
    %v229 = vld [vmem:[%s5 + $0x2c] sm:$0xf]
    %v230 = vld [vmem:[%s5 + $0x30] sm:$0xf]
    %v231 = vld [vmem:[%s5 + $0x34] sm:$0xf]
    %v232 = vld [vmem:[%s5 + $0x38] sm:$0xf]
    %v233 = vld [vmem:[%s5 + $0x3c] sm:$0xf]
    %v234 = vld [vmem:[%s6] sm:$0x1]
    %v236 = vlaneseq
    %v237 = vshrl.u32 %v236, 7
    %v238 = vsub.s32 0, %v237
    %v239 = vrot.slane %v234, %v238
    %v257 = vunpack.c.l.b16 %v218
    %v258 = vunpack.c.l.b16 %v219
    %v259 = vunpack.c.l.b16 %v220
    %v260 = vunpack.c.l.b16 %v221
    %v261 = vunpack.c.l.b16 %v222
    %v262 = vunpack.c.l.b16 %v223
    %v263 = vunpack.c.l.b16 %v224
    %v264 = vunpack.c.l.b16 %v225
    %v265 = vunpack.c.l.b16 %v226
    %v266 = vunpack.c.l.b16 %v227
    %v267 = vunpack.c.l.b16 %v228
    %v268 = vunpack.c.l.b16 %v229
    %v269 = vunpack.c.l.b16 %v230
    %v270 = vunpack.c.l.b16 %v231
    %v271 = vunpack.c.l.b16 %v232
    %v272 = vunpack.c.l.b16 %v233
    %v273 = vpack.c.b16 %v258, %v257
    %v274 = vpack.c.b16 %v260, %v259
    %v275 = vpack.c.b16 %v262, %v261
    %v276 = vpack.c.b16 %v264, %v263
    %v277 = vpack.c.b16 %v266, %v265
    %v278 = vpack.c.b16 %v268, %v267
    %v279 = vpack.c.b16 %v270, %v269
    %v280 = vpack.c.b16 %v272, %v271
    %289 = vmatprep.subr.bf16.mxu0 0
    %290 = vmatpush1.bf16.msra.mxu0 %v273
    %291 = vmatprep.subr.bf16.mxu0 0
    %292 = vmatpush1.bf16.msra.mxu0 %v274
    %293 = vmatprep.subr.bf16.mxu0 0
    %294 = vmatpush1.bf16.msra.mxu0 %v275
    %295 = vmatprep.subr.bf16.mxu0 0
    %296 = vmatpush1.bf16.msra.mxu0 %v276
    %297 = vmatprep.subr.bf16.mxu0 0
    %298 = vmatpush1.bf16.msra.mxu0 %v277
    %299 = vmatprep.subr.bf16.mxu0 0
    %300 = vmatpush1.bf16.msra.mxu0 %v278
    %301 = vmatprep.subr.bf16.mxu0 0
    %302 = vmatpush1.bf16.msra.mxu0 %v279
    %303 = vmatprep.subr.bf16.mxu0 0
    %304 = vmatpush1.bf16.msra.mxu0 %v280
    %305 = vmatprep.subr.bf16.mxu0 0
    %306 = vmatpush1.bf16.msra.mxu0 0
    %307 = vmatprep.subr.bf16.mxu0 0
    %308 = vmatpush1.bf16.msra.mxu0 0
    %309 = vmatprep.subr.bf16.mxu0 0
    %310 = vmatpush1.bf16.msra.mxu0 0
    %311 = vmatprep.subr.bf16.mxu0 0
    %312 = vmatpush1.bf16.msra.mxu0 0
    %313 = vmatprep.subr.bf16.mxu0 0
    %314 = vmatpush1.bf16.msra.mxu0 0
    %315 = vmatprep.subr.bf16.mxu0 0
    %316 = vmatpush1.bf16.msra.mxu0 0
    %317 = vmatprep.subr.bf16.mxu0 0
    %318 = vmatpush1.bf16.msra.mxu0 0
    %319 = vmatprep.subr.bf16.mxu0 0
    %320 = vmatpush1.bf16.msra.mxu0 0
    %321 = vmatprep.mubr.bf16.mxu0 0
    %322 = vmatmul.mubr.bf16.gmra.mrb[0].mxu0 %v217
    %v323 = vpop.f32.mrb[0].mxu0
    %v324 = vadd.f32 %v239, %v323
    %v325 = vpop.f32.mrb[0].mxu0
    %v326 = vpop.f32.mrb[0].mxu0
    %v327 = vpop.f32.mrb[0].mxu0
    %328 = vdwg.mxu0
    %vm329 = vcmask 64512
    %330 = vst.msk [vmem:[#allocation5] sm:$0xff] %vm329, %v324
    // Predicated region
    $region34: #{dqn_forward.1} parent=1 // pred_check
      _
    $region35: #{dqn_forward.1} parent=1 // pred_check_branch
      %332 = sbr.rel (0) target = $region37
    $region36: #{dqn_forward.1} parent=1 // pred_region
      %s334 = ssub.s32 128, 128
      %335 = vsyncadd [#allocation4], %s334
      %s337 = sshll.u32 [#allocation5], 4
      %s338 = int_to_ptr.vmem [resolvable:$true] %s337
      %340 = dma.vmem_to_hbm [thread:$0]  %s338, 128, %s7, [#allocation4]
    $region37: #{dqn_forward.1} parent=1 // pred_fallthru
      _
    // Predicated region
    $region38: #{dqn_forward.1} parent=1 // pred_check
      _
    $region39: #{dqn_forward.1} parent=1 // pred_check_branch
      %342 = sbr.rel (0) target = $region41
    $region40: #{dqn_forward.1} parent=1 // pred_region
      %343 = dma.done [#allocation4], 128
    $region41: #{dqn_forward.1} parent=1 // pred_fallthru
      _
    %344 = vsyncpa [#allocation3], 1
    %345 = vsyncpa [#allocation4], 1

</llo_original>
